<compile_context>
chip_gen: v7x
topology: tpu7x:2x2x1
jax: 0.10.0
libtpu: 0.0.40
codegen_flags: <defaults>
</compile_context>

<pallas_src>
import jax
import jax.numpy as jnp
from jax.experimental import pallas as pl
from jax.experimental.pallas import tpu as pltpu


def mlp_kernel(x_ref, w_ref, b_ref, o_ref):
    # x_ref: (tb, D) VMEM, w_ref: (1, D) VMEM, b_ref: (1, 1) SMEM, o_ref: (tb, 1)
    x = x_ref[...]                                   # (tb, D)
    w = w_ref[...]                                   # (1, D) -- broadcasts over rows
    bias = b_ref[0, 0]                               # scalar from SMEM
    # VPU multiply + XLU lane reduce; stays entirely off the MXU, no transpose.
    y = jnp.sum(x * w, axis=-1, keepdims=True)       # (tb, 1) f32
    o_ref[...] = (y + bias).astype(o_ref.dtype)


def _pick_batch_tile(B, D, itemsize=4, target_bytes=4 << 20):
    """Largest divisor of B whose (tile, D) input buffer is <= ~target_bytes.

    Keeps double-buffered inputs small enough for v7x's 32 MiB scoped-VMEM
    default while giving the grid >= 2 steps when B is large (2 TCs on v7x).
    """
    max_rows = max(1, target_bytes // (D * itemsize))
    if B <= max_rows:
        return B
    best = 1
    for cand in range(1, min(B, max_rows) + 1):
        if B % cand == 0:
            best = cand
    return best


def mlp_forward(x, w, b, *, tb=None):
    """x: (B, D) f32, w: (1, D) f32, b: (1,) f32 -> (B, 1) f32."""
    B, D = x.shape
    if tb is None:
        tb = _pick_batch_tile(B, D)   # at small B this is just B -> grid=(1,)
    assert B % tb == 0
    b2 = jnp.asarray(b).reshape(1, 1)

    return pl.pallas_call(
        mlp_kernel,
        out_shape=jax.ShapeDtypeStruct((B, 1), x.dtype),
        grid_spec=pltpu.PrefetchScalarGridSpec(
            num_scalar_prefetch=0,
            grid=(B // tb,),
            in_specs=[
                pl.BlockSpec((tb, D), lambda i: (i, 0)),          # x tile (VMEM)
                pl.BlockSpec((1, D), lambda i: (0, 0)),           # full weight (VMEM)
                pl.BlockSpec(memory_space=pltpu.MemorySpace.SMEM),  # bias scalar (SMEM)
            ],
            out_specs=pl.BlockSpec((tb, 1), lambda i: (i, 0)),
            # TODO(synk): out_features=1 forces a lane-width-1 output (masked
            # vst); if the layer ever widens, map out_features to lanes in
            # multiples of 128 and switch back to an MXU matmul.
        ),
        compiler_params=pltpu.CompilerParams(
            dimension_semantics=("parallel",)
        ),
    )(x, w, b2)


if __name__ == "__main__":
    # Small shapes consistent with MLP(nb_input=32): batch=8, features=32.
    B, D = 8, 32
    key = jax.random.PRNGKey(0)
    kx, kw, kb = jax.random.split(key, 3)

    x = jax.random.normal(kx, (B, D), dtype=jnp.float32)
    # Deterministic parameter init mimicking nn.Linear's uniform(-1/sqrt(D), 1/sqrt(D)).
    bound = 1.0 / jnp.sqrt(jnp.float32(D))
    w = jax.random.uniform(kw, (1, D), minval=-bound, maxval=bound, dtype=jnp.float32)
    b = jax.random.uniform(kb, (1,), minval=-bound, maxval=bound, dtype=jnp.float32)

    y = mlp_forward(x, w, b)
    jax.block_until_ready(y)

    # Reference check in plain JAX (same semantics as torch.nn.Linear forward).
    y_ref = x @ w.T + b
    assert y.shape == (B, 1)
    assert jnp.allclose(y, y_ref, atol=1e-5, rtol=1e-5)

    print("KERNEL_OK")
</pallas_src>

<mosaic_0001>
module attributes {stable_mosaic.version = 11 : i64} {
  func.func @mlp_kernel(%arg0: i32, %arg1: memref<8x32xf32, #tpu.memory_space<vmem>>, %arg2: memref<1x32xf32, #tpu.memory_space<vmem>>, %arg3: memref<1x1xf32, #tpu.memory_space<smem>>, %arg4: memref<8x1xf32, #tpu.memory_space<vmem>>) attributes {dimension_semantics = [#tpu.dimension_semantics<parallel>], iteration_bounds = array<i64: 1>, scalar_prefetch = 0 : i64, scratch_operands = 0 : i64, tpu.core_type = #tpu.core_type<tc>, window_params = [{transform_indices = @transform_0, window_bounds = array<i64: 8, 32>}, {pipeline_mode = #tpu.pipeline_mode<synchronous>, transform_indices = @transform_1, window_bounds = array<i64: 1, 32>}, {transform_indices = @transform_2, window_bounds = array<i64: 1, 1>}, {transform_indices = @transform_3, window_bounds = array<i64: 8, 1>}]} {
    %c0 = arith.constant 0 : index
    %c0_0 = arith.constant 0 : index
    %0 = vector.load %arg1[%c0, %c0_0] : memref<8x32xf32, #tpu.memory_space<vmem>>, vector<8x32xf32>
    %c0_1 = arith.constant 0 : index
    %c0_2 = arith.constant 0 : index
    %1 = vector.load %arg2[%c0_1, %c0_2] : memref<1x32xf32, #tpu.memory_space<vmem>>, vector<1x32xf32>
    %c0_3 = arith.constant 0 : index
    %c0_4 = arith.constant 0 : index
    %2 = memref.load %arg3[%c0_3, %c0_4] : memref<1x1xf32, #tpu.memory_space<smem>>
    %3 = vector.broadcast %1 : vector<1x32xf32> to vector<8x32xf32>
    %4 = arith.mulf %0, %3 : vector<8x32xf32>
    %cst = arith.constant dense<0.000000e+00> : vector<8xf32>
    %5 = vector.multi_reduction <add>, %4, %cst [1] : vector<8x32xf32> to vector<8xf32>
    %6 = vector.shape_cast %5 : vector<8xf32> to vector<8x1xf32>
    %7 = vector.broadcast %2 : f32 to vector<8x1xf32>
    %8 = arith.addf %6, %7 : vector<8x1xf32>
    %c0_5 = arith.constant 0 : index
    %c0_6 = arith.constant 0 : index
    %9 = vector.load %arg4[%c0_5, %c0_6] : memref<8x1xf32, #tpu.memory_space<vmem>>, vector<8x1xf32>
    tpu.vector_store %arg4[%c0_5, %c0_6], %8 {strides = array<i32>} : memref<8x1xf32, #tpu.memory_space<vmem>>, vector<8x1xf32>,
    return
  }
  func.func @transform_0(%arg0: i32) -> (i32, i32) {
    %c0_i32 = arith.constant 0 : i32
    %c0_i32_0 = arith.constant 0 : i32
    return %arg0, %c0_i32 : i32, i32
  }
  func.func @transform_1(%arg0: i32) -> (i32, i32) {
    %c0_i32 = arith.constant 0 : i32
    %c0_i32_0 = arith.constant 0 : i32
    %c0_i32_1 = arith.constant 0 : i32
    return %c0_i32, %c0_i32_0 : i32, i32
  }
  func.func @transform_2(%arg0: i32) -> (i32, i32) {
    %c0_i32 = arith.constant 0 : i32
    %c0_i32_0 = arith.constant 0 : i32
    %c0_i32_1 = arith.constant 0 : i32
    return %c0_i32, %c0_i32_0 : i32, i32
  }
  func.func @transform_3(%arg0: i32) -> (i32, i32) {
    %c0_i32 = arith.constant 0 : i32
    %c0_i32_0 = arith.constant 0 : i32
    return %arg0, %c0_i32 : i32, i32
  }
}

</mosaic_0001>

<llo_original>
// kernel: tpu_custom_call.1
$region0: #{tpu_custom_call.1}
  #allocation0 [shape = 'u32[]', space=smem, size = 0x4, offset = 0x4, fixed_abs, tag = 'smem constant byte address 0x4 - core index']
  #allocation1 [shape = 'u32[144,128]{1,0:T(1,128)}', space=vmem, size = 0x12000, scoped, tag = 'internal scratch']
  #allocation2 [shape = 'f32[1,1]{1,0:T(1,128)S(6)}', space=smem, size = 0x200, scoped, tag = 'scoped memory for tpu_custom_call.1']
  %s0 = inlined_call_operand.hbm [shape: f32[8,32], index: 0, kind: input, shape index: {}]
  %s1 = inlined_call_operand.vmem [shape: f32[1,32], index: 1, kind: input, shape index: {}]
  %s2 = inlined_call_operand.<no memory space> [shape: f32[1,1], index: 2, kind: input, shape index: {}]
  %s3 = inlined_call_operand.vmem [shape: f32[8,1], index: 3, kind: output, shape index: {}]
  %s4 = sld [smem:[#allocation0]]
  $region26: #{tpu_custom_call.1} parent=0
    _
  %s6 = ssub.s32 1, %s4
  %s7 = scalar_select 0, %s6, %s4
  %8 = sst [smem:[#allocation2]] %s2
  $region1: #{tpu_custom_call.1} parent=0
    #allocation3 [shape = 'u8[4096]{0}', space=vmem, size = 0x1000, scoped, tag = 'input window, operand 0, single buffered']
    #allocation4 [shape = 's32[1]{0}', space=sflag, size = 0x4, scoped, tag = 'scoped memory for tpu_custom_call.1']
    %9 = vsyncpa [#allocation4], 0
    // Predicated region
    $region2: #{tpu_custom_call.1} parent=1 // pred_check
      _
    $region3: #{tpu_custom_call.1} parent=1 // pred_check_branch
      %11 = sbr.rel (0) target = $region5
    $region4: #{tpu_custom_call.1} parent=1 // pred_region
      %s13 = ssub.s32 128, 128
      %14 = vsyncadd [#allocation4], %s13
      %s16 = sshll.u32 [#allocation3], 4
      %s17 = int_to_ptr.vmem [resolvable:$true] %s16
      %19 = dma.hbm_to_vmem [thread:$0]  %s0, 128, %s17, [#allocation4]
    $region5: #{tpu_custom_call.1} parent=1 // pred_fallthru
      _
    // Predicated region
    $region6: #{tpu_custom_call.1} parent=1 // pred_check
      _
    $region7: #{tpu_custom_call.1} parent=1 // pred_check_branch
      %21 = sbr.rel (0) target = $region9
    $region8: #{tpu_custom_call.1} parent=1 // pred_region
      _
    $region9: #{tpu_custom_call.1} parent=1 // pred_fallthru
      _
    // Predicated region
    $region10: #{tpu_custom_call.1} parent=1 // pred_check
      _
    $region11: #{tpu_custom_call.1} parent=1 // pred_check_branch
      %23 = sbr.rel (0) target = $region13
    $region12: #{tpu_custom_call.1} parent=1 // pred_region
      _
    $region13: #{tpu_custom_call.1} parent=1 // pred_fallthru
      _
    // Predicated region
    $region14: #{tpu_custom_call.1} parent=1 // pred_check
      _
    $region15: #{tpu_custom_call.1} parent=1 // pred_check_branch
      %25 = sbr.rel (0) target = $region17
    $region16: #{tpu_custom_call.1} parent=1 // pred_region
      %26 = dma.done [#allocation4], 128
    $region17: #{tpu_custom_call.1} parent=1 // pred_fallthru
      _
    %v27 = vld [vmem:[#allocation3] sm:$0xff]
    %v28 = vld [vmem:[%s1] sm:$0x1]
    %s29 = sld [smem:[#allocation2]]
    %v31 = vlaneseq
    %v32 = vshrl.u32 %v31, 7
    %v33 = vsub.s32 0, %v32
    %v34 = vrot.slane %v28, %v33
    %v36 = vmul.f32 %v27, %v34
    %vm37 = vcmask 261120
    %v38 = vsel %vm37, %v36, 0.0
    %39 = vadd.xlane.f32.xlu0 %v38
    %v40 = vpop.xlane.xlu0 %39
    %v41 = vstv %s29
    %v42 = vadd.f32 %v40, %v41
    %vm43 = vcmask 7168
    %44 = vst.msk [vmem:[%s3] sm:$0xff] %vm43, %v42
    // Predicated region
    $region18: #{tpu_custom_call.1} parent=1 // pred_check
      _
    $region19: #{tpu_custom_call.1} parent=1 // pred_check_branch
      %46 = sbr.rel (0) target = $region21
    $region20: #{tpu_custom_call.1} parent=1 // pred_region
      _
    $region21: #{tpu_custom_call.1} parent=1 // pred_fallthru
      _
    // Predicated region
    $region22: #{tpu_custom_call.1} parent=1 // pred_check
      _
    $region23: #{tpu_custom_call.1} parent=1 // pred_check_branch
      %48 = sbr.rel (0) target = $region25
    $region24: #{tpu_custom_call.1} parent=1 // pred_region
      _
    $region25: #{tpu_custom_call.1} parent=1 // pred_fallthru
      _
    %49 = vsyncpa [#allocation4], 1

</llo_original>
